<compile_context>
chip_gen: v7x
topology: tpu7x:2x2x1
jax: 0.10.0
libtpu: 0.0.40
codegen_flags: <defaults>
</compile_context>

<pallas_src>
import functools

import jax
import jax.numpy as jnp
from jax.experimental import pallas as pl
from jax.experimental.pallas import tpu as pltpu

EPS = 1e-5  # BatchNorm1d default eps


def _feat_fusion_kernel(dilation, l_out, l_pad,
                        xcat_hbm, w_ref, gamma_ref, beta_ref, o_ref,
                        xstage_ref, rhs_ref, dma_sem):
    # xcat_hbm:   (N, 2C, L_in_pad)   raw HBM ref (memory_space=pl.ANY), grid-invariant
    # w_ref:      (C_blk, K*2C)       im2col-ordered stacked conv weights (tap outer, chan inner)
    # gamma_ref:  (C_blk, 1) f32      BN gamma
    # beta_ref:   (C_blk, 1) f32      BN beta
    # o_ref:      (C_blk, N*L_pad)    lane-dense output (padded lanes sliced off in wrapper)
    # xstage_ref: (N, 2C, L_in_pad)   VMEM staging for the input (single-buffered)
    # rhs_ref:    (K*2C, N*L_pad)     persistent im2col RHS, built once, reused by all steps
    n_batch, c2, _ = xstage_ref.shape
    k_taps = rhs_ref.shape[0] // c2

    @pl.when(pl.program_id(0) == 0)
    def _build_rhs():
        # One manual DMA of the (grid-invariant) input, then build the im2col RHS once.
        cp = pltpu.make_async_copy(xcat_hbm, xstage_ref, dma_sem)
        cp.start()
        cp.wait()
        for nn in range(n_batch):                 # static: batch is small & compile-time
            xn = xstage_ref[nn]                   # (2C, L_in_pad)
            for kk in range(k_taps):              # static: K taps
                rhs_ref[kk * c2:(kk + 1) * c2, nn * l_pad:(nn + 1) * l_pad] = (
                    xn[:, kk * dilation:kk * dilation + l_pad])

    # Single MXU matmul per grid step: bf16 (or f32) operands, f32 accumulation.
    acc = jnp.dot(w_ref[...], rhs_ref[...],
                  preferred_element_type=jnp.float32)   # (C_blk, N*L_pad) f32

    # BatchNorm1d training-mode (biased) batch stats per channel over (N, L_out),
    # computed in one pass; padded lanes are masked out of the statistics.
    if l_pad == l_out:
        acc_m = acc
    else:
        lane = jax.lax.broadcasted_iota(jnp.int32, acc.shape, 1)
        acc_m = jnp.where((lane % l_pad) < l_out, acc, 0.0)

    inv_cnt = 1.0 / float(n_batch * l_out)
    s1 = jnp.sum(acc_m, axis=1, keepdims=True)           # (C_blk, 1)
    s2 = jnp.sum(acc_m * acc_m, axis=1, keepdims=True)   # (C_blk, 1)
    mean = s1 * inv_cnt
    var = s2 * inv_cnt - mean * mean
    scale = gamma_ref[...] * jax.lax.rsqrt(var + EPS)    # (C_blk, 1)
    shift = beta_ref[...] - mean * scale
    # TODO(synk): BatchNorm1d running_mean / running_var buffer updates (training
    # side-effect) are not reproduced here.
    o_ref[...] = jax.nn.sigmoid(acc * scale + shift).astype(o_ref.dtype)


def feat_fusion_conv(x_ncl, cnf_ncl, w_x, w_cnf, gamma, beta, *, dilation,
                     compute_dtype=jnp.bfloat16, c_blk=None):
    """x_ncl, cnf_ncl: (N, C, L) f32; w_*: (C_out, C_in, K); gamma/beta: (C,)."""
    n, c, l = x_ncl.shape
    c_out, c_in, k = w_x.shape
    assert c_in == c and c_out == c and w_cnf.shape == w_x.shape
    l_out = l - dilation * (k - 1)
    assert l_out > 0

    # Lane-dense output: pad L_out up to a multiple of 128; input gets the matching halo.
    l_pad = max(128, ((l_out + 127) // 128) * 128)
    l_in_pad = l_pad + dilation * (k - 1)

    # MXU-friendly channel blocking: whole thing for small C (grid of 1), else 256/128 rows.
    if c_blk is None:
        c_blk = c_out
        for cand in (256, 128):
            if c_out > cand and c_out % cand == 0:
                c_blk = cand
                break
    c_blk = min(c_blk, c_out)
    assert c_out % c_blk == 0

    # Fuse the two convolutions: concat inputs on channels; stack + im2col the weights so
    # the kernel does a single (C_blk, K*2C) @ (K*2C, N*L_pad) matmul per grid step.
    xcat = jnp.concatenate([x_ncl, cnf_ncl], axis=1)                       # (N, 2C, L)
    xcat = jnp.pad(xcat, ((0, 0), (0, 0), (0, l_in_pad - l)))              # (N, 2C, L_in_pad)
    xcat = xcat.astype(compute_dtype)                                      # bf16 operands (explicit)
    w_cat = jnp.concatenate([w_x, w_cnf], axis=1)                          # (C, 2C, K)
    w2 = jnp.transpose(w_cat, (0, 2, 1)).reshape(c_out, k * 2 * c)         # tap-outer, chan-inner
    w2 = w2.astype(compute_dtype)
    g2 = gamma.reshape(c_out, 1).astype(jnp.float32)
    b2 = beta.reshape(c_out, 1).astype(jnp.float32)

    kernel = functools.partial(_feat_fusion_kernel, dilation, l_out, l_pad)

    out2d = pl.pallas_call(
        kernel,
        out_shape=jax.ShapeDtypeStruct((c_out, n * l_pad), jnp.float32),
        grid_spec=pltpu.PrefetchScalarGridSpec(
            num_scalar_prefetch=0,
            grid=(c_out // c_blk,),
            in_specs=[
                pl.BlockSpec(memory_space=pl.ANY),                       # xcat stays in HBM
                pl.BlockSpec((c_blk, k * 2 * c), lambda i: (i, 0)),      # weights per channel block
                pl.BlockSpec((c_blk, 1), lambda i: (i, 0)),              # gamma
                pl.BlockSpec((c_blk, 1), lambda i: (i, 0)),              # beta
            ],
            out_specs=pl.BlockSpec((c_blk, n * l_pad), lambda i: (i, 0)),
            scratch_shapes=[
                pltpu.VMEM((n, 2 * c, l_in_pad), compute_dtype),         # input staging (single-buffered)
                pltpu.VMEM((k * 2 * c, n * l_pad), compute_dtype),       # im2col RHS, built once
                pltpu.SemaphoreType.DMA(()),
            ],
        ),
        compiler_params=pltpu.CompilerParams(
            # "arbitrary": grid steps are sequential -> the build-once RHS scratch is safe
            # and the invariant input is not re-DMA'd per TensorCore (v7x concern).
            dimension_semantics=("arbitrary",),
            vmem_limit_bytes=32 * 1024 * 1024,
        ),
    )(xcat, w2, g2, b2)

    # Cheap wrapper-side layout plumbing: drop padded lanes, restore PyTorch (N, C, L_out).
    out = out2d.reshape(c_out, n, l_pad)[:, :, :l_out]
    return jnp.transpose(out, (1, 0, 2))


def _reference(x_ncl, cnf_ncl, w_x, w_cnf, gamma, beta, dilation,
               compute_dtype=jnp.float32):
    dn = jax.lax.conv_dimension_numbers(x_ncl.shape, w_x.shape, ("NCH", "OIH", "NCH"))
    conv = lambda a, w: jax.lax.conv_general_dilated(
        a.astype(compute_dtype), w.astype(compute_dtype), (1,), "VALID",
        rhs_dilation=(dilation,), dimension_numbers=dn,
        preferred_element_type=jnp.float32)
    s = conv(x_ncl, w_x) + conv(cnf_ncl, w_cnf)
    mean = s.mean(axis=(0, 2), keepdims=True)
    var = ((s - mean) ** 2).mean(axis=(0, 2), keepdims=True)
    y = (s - mean) * jax.lax.rsqrt(var + EPS)
    y = y * gamma[None, :, None] + beta[None, :, None]
    return jax.nn.sigmoid(y)


if __name__ == "__main__":
    batch, channels, length = 2, 16, 64
    kernel_size, dilation = 3, 2

    key = jax.random.PRNGKey(0)
    kx, kc, kwx, kwc, kg, kb = jax.random.split(key, 6)

    x = jax.random.normal(kx, (batch, channels, length), jnp.float32)
    cnf = jax.random.normal(kc, (batch, channels, length), jnp.float32)
    # Conv1d weights: (out_channels, in_channels, kernel_size), bias=False
    bound = 1.0 / (channels * kernel_size) ** 0.5
    w_x = jax.random.uniform(kwx, (channels, channels, kernel_size),
                             jnp.float32, -bound, bound)
    w_cnf = jax.random.uniform(kwc, (channels, channels, kernel_size),
                               jnp.float32, -bound, bound)
    # BatchNorm1d affine params (non-trivial values to exercise the folded affine)
    gamma = jax.random.uniform(kg, (channels,), jnp.float32, 0.5, 1.5)
    beta = 0.1 * jax.random.normal(kb, (channels,), jnp.float32)

    out = feat_fusion_conv(x, cnf, w_x, w_cnf, gamma, beta, dilation=dilation)
    out = jax.block_until_ready(out)

    l_out = length - dilation * (kernel_size - 1)
    assert out.shape == (batch, channels, l_out)

    # Exact-math check: reference that applies the same bf16 operand rounding as the
    # kernel (only reduction-order differences remain -> ~1e-6).
    ref_bf16 = _reference(x, cnf, w_x, w_cnf, gamma, beta, dilation,
                          compute_dtype=jnp.bfloat16)
    assert jnp.allclose(out, ref_bf16, rtol=1e-4, atol=1e-4)

    # Fidelity check vs. the full-f32 reference (bf16 MXU operands, f32 accumulation).
    ref_f32 = _reference(x, cnf, w_x, w_cnf, gamma, beta, dilation,
                         compute_dtype=jnp.float32)
    assert jnp.allclose(out, ref_f32, atol=5e-2)

    print("KERNEL_OK")
</pallas_src>

<mosaic_0001>
module attributes {stable_mosaic.version = 11 : i64} {
  func.func @_feat_fusion_kernel(%arg0: i32, %arg1: memref<2x32x132xbf16, #tpu.memory_space<any>>, %arg2: memref<16x96xbf16, #tpu.memory_space<vmem>>, %arg3: memref<16x1xf32, #tpu.memory_space<vmem>>, %arg4: memref<16x1xf32, #tpu.memory_space<vmem>>, %arg5: memref<16x256xf32, #tpu.memory_space<vmem>>, %arg6: memref<2x32x132xbf16, #tpu.memory_space<vmem>>, %arg7: memref<96x256xbf16, #tpu.memory_space<vmem>>, %arg8: memref<!tpu.dma_semaphore, #tpu.memory_space<semaphore_mem>>) attributes {dimension_semantics = [#tpu.dimension_semantics<arbitrary>], iteration_bounds = array<i64: 1>, scalar_prefetch = 0 : i64, scratch_operands = 3 : i64, tpu.core_type = #tpu.core_type<tc>, window_params = [{}, {transform_indices = @transform_1, window_bounds = array<i64: 16, 96>}, {transform_indices = @transform_2, window_bounds = array<i64: 16, 1>}, {transform_indices = @transform_3, window_bounds = array<i64: 16, 1>}, {transform_indices = @transform_4, window_bounds = array<i64: 16, 256>}]} {
    %c0_i32 = arith.constant 0 : i32
    %0 = arith.cmpi eq, %arg0, %c0_i32 : i32
    %1 = arith.extui %0 : i1 to i32
    %c0_i32_0 = arith.constant 0 : i32
    %2 = arith.cmpi ne, %1, %c0_i32_0 : i32
    scf.if %2 {
      tpu.enqueue_dma source(%arg1 : memref<2x32x132xbf16, #tpu.memory_space<any>>) target(%arg6 : memref<2x32x132xbf16, #tpu.memory_space<vmem>>) target_semaphore(%arg8 : memref<!tpu.dma_semaphore, #tpu.memory_space<semaphore_mem>>)
      tpu.wait_dma2 semaphore(%arg8 : memref<!tpu.dma_semaphore, #tpu.memory_space<semaphore_mem>>) src(%arg1 : memref<2x32x132xbf16, #tpu.memory_space<any>>) dst(%arg6 : memref<2x32x132xbf16, #tpu.memory_space<vmem>>)
      %c0_21 = arith.constant 0 : index
      %c0_22 = arith.constant 0 : index
      %c0_23 = arith.constant 0 : index
      %56 = vector.load %arg6[%c0_21, %c0_22, %c0_23] : memref<2x32x132xbf16, #tpu.memory_space<vmem>>, vector<1x32x132xbf16>
      %57 = vector.shape_cast %56 : vector<1x32x132xbf16> to vector<32x132xbf16>
      %58 = vector.extract_strided_slice %57 {offsets = [0, 0], sizes = [32, 128], strides = [1, 1]} : vector<32x132xbf16> to vector<32x128xbf16>
      %c0_24 = arith.constant 0 : index
      %c0_25 = arith.constant 0 : index
      %59 = vector.load %arg7[%c0_24, %c0_25] : memref<96x256xbf16, #tpu.memory_space<vmem>>, vector<32x128xbf16>
      tpu.vector_store %arg7[%c0_24, %c0_25], %58 {strides = array<i32>} : memref<96x256xbf16, #tpu.memory_space<vmem>>, vector<32x128xbf16>,
      %60 = vector.extract_strided_slice %57 {offsets = [0, 2], sizes = [32, 128], strides = [1, 1]} : vector<32x132xbf16> to vector<32x128xbf16>
      %c32 = arith.constant 32 : index
      %c0_26 = arith.constant 0 : index
      %61 = vector.load %arg7[%c32, %c0_26] : memref<96x256xbf16, #tpu.memory_space<vmem>>, vector<32x128xbf16>
      tpu.vector_store %arg7[%c32, %c0_26], %60 {strides = array<i32>} : memref<96x256xbf16, #tpu.memory_space<vmem>>, vector<32x128xbf16>,
      %62 = vector.extract_strided_slice %57 {offsets = [0, 4], sizes = [32, 128], strides = [1, 1]} : vector<32x132xbf16> to vector<32x128xbf16>
      %c64 = arith.constant 64 : index
      %c0_27 = arith.constant 0 : index
      %63 = vector.load %arg7[%c64, %c0_27] : memref<96x256xbf16, #tpu.memory_space<vmem>>, vector<32x128xbf16>
      tpu.vector_store %arg7[%c64, %c0_27], %62 {strides = array<i32>} : memref<96x256xbf16, #tpu.memory_space<vmem>>, vector<32x128xbf16>,
      %c1 = arith.constant 1 : index
      %c0_28 = arith.constant 0 : index
      %c0_29 = arith.constant 0 : index
      %64 = vector.load %arg6[%c1, %c0_28, %c0_29] : memref<2x32x132xbf16, #tpu.memory_space<vmem>>, vector<1x32x132xbf16>
      %65 = vector.shape_cast %64 : vector<1x32x132xbf16> to vector<32x132xbf16>
      %66 = vector.extract_strided_slice %65 {offsets = [0, 0], sizes = [32, 128], strides = [1, 1]} : vector<32x132xbf16> to vector<32x128xbf16>
      %c0_30 = arith.constant 0 : index
      %c128 = arith.constant 128 : index
      %67 = vector.load %arg7[%c0_30, %c128] : memref<96x256xbf16, #tpu.memory_space<vmem>>, vector<32x128xbf16>
      tpu.vector_store %arg7[%c0_30, %c128], %66 {strides = array<i32>} : memref<96x256xbf16, #tpu.memory_space<vmem>>, vector<32x128xbf16>,
      %68 = vector.extract_strided_slice %65 {offsets = [0, 2], sizes = [32, 128], strides = [1, 1]} : vector<32x132xbf16> to vector<32x128xbf16>
      %c32_31 = arith.constant 32 : index
      %c128_32 = arith.constant 128 : index
      %69 = vector.load %arg7[%c32_31, %c128_32] : memref<96x256xbf16, #tpu.memory_space<vmem>>, vector<32x128xbf16>
      tpu.vector_store %arg7[%c32_31, %c128_32], %68 {strides = array<i32>} : memref<96x256xbf16, #tpu.memory_space<vmem>>, vector<32x128xbf16>,
      %70 = vector.extract_strided_slice %65 {offsets = [0, 4], sizes = [32, 128], strides = [1, 1]} : vector<32x132xbf16> to vector<32x128xbf16>
      %c64_33 = arith.constant 64 : index
      %c128_34 = arith.constant 128 : index
      %71 = vector.load %arg7[%c64_33, %c128_34] : memref<96x256xbf16, #tpu.memory_space<vmem>>, vector<32x128xbf16>
      tpu.vector_store %arg7[%c64_33, %c128_34], %70 {strides = array<i32>} : memref<96x256xbf16, #tpu.memory_space<vmem>>, vector<32x128xbf16>,
    } else {
    }
    %c0 = arith.constant 0 : index
    %c0_1 = arith.constant 0 : index
    %3 = vector.load %arg2[%c0, %c0_1] : memref<16x96xbf16, #tpu.memory_space<vmem>>, vector<16x96xbf16>
    %c0_2 = arith.constant 0 : index
    %c0_3 = arith.constant 0 : index
    %4 = vector.load %arg7[%c0_2, %c0_3] : memref<96x256xbf16, #tpu.memory_space<vmem>>, vector<96x256xbf16>
    %cst = arith.constant dense<0.000000e+00> : vector<16x256xf32>
    %5 = tpu.matmul %3, %4, %cst {dimension_numbers = #tpu.dot_dimension_numbers<[1], [0], [0], [1], [0, 0, 1, 1], [], []>} : vector<16x96xbf16>, vector<96x256xbf16>, vector<16x256xf32> -> vector<16x256xf32>
    %6 = tpu.iota {dimensions = array<i32: 1>} : vector<16x256xi32>
    %c128_i32 = arith.constant 128 : i32
    %c0_i32_4 = arith.constant 0 : i32
    %7 = arith.cmpi eq, %c128_i32, %c0_i32_4 : i32
    %c1_i32 = arith.constant 1 : i32
    %8 = arith.select %7, %c1_i32, %c128_i32 : i32
    %9 = vector.broadcast %8 : i32 to vector<16x256xi32>
    %10 = arith.remsi %6, %9 : vector<16x256xi32>
    %c0_i32_5 = arith.constant 0 : i32
    %11 = vector.broadcast %c0_i32_5 : i32 to vector<16x256xi32>
    %12 = arith.cmpi ne, %10, %11 : vector<16x256xi32>
    %c0_i32_6 = arith.constant 0 : i32
    %13 = vector.broadcast %c0_i32_6 : i32 to vector<16x256xi32>
    %14 = arith.cmpi slt, %10, %13 : vector<16x256xi32>
    %c0_i32_7 = arith.constant 0 : i32
    %15 = arith.cmpi slt, %8, %c0_i32_7 : i32
    %16 = vector.broadcast %15 : i1 to vector<16x256xi1>
    %17 = vector.broadcast %16 : vector<16x256xi1> to vector<16x256xi1>
    %18 = arith.xori %14, %17 : vector<16x256xi1>
    %19 = arith.andi %18, %12 : vector<16x256xi1>
    %20 = vector.broadcast %8 : i32 to vector<16x256xi32>
    %21 = arith.addi %10, %20 : vector<16x256xi32>
    %22 = arith.select %19, %21, %10 : vector<16x256xi1>, vector<16x256xi32>
    %c60_i32 = arith.constant 60 : i32
    %23 = vector.broadcast %c60_i32 : i32 to vector<16x256xi32>
    %24 = arith.cmpi slt, %22, %23 : vector<16x256xi32>
    %cst_8 = arith.constant 0.000000e+00 : f32
    %25 = vector.broadcast %cst_8 : f32 to vector<16x256xf32>
    %26 = arith.select %24, %5, %25 : vector<16x256xi1>, vector<16x256xf32>
    %cst_9 = arith.constant dense<0.000000e+00> : vector<16xf32>
    %27 = vector.multi_reduction <add>, %26, %cst_9 [1] : vector<16x256xf32> to vector<16xf32>
    %28 = vector.shape_cast %27 : vector<16xf32> to vector<16x1xf32>
    %29 = arith.mulf %26, %26 : vector<16x256xf32>
    %cst_10 = arith.constant dense<0.000000e+00> : vector<16xf32>
    %30 = vector.multi_reduction <add>, %29, %cst_10 [1] : vector<16x256xf32> to vector<16xf32>
    %31 = vector.shape_cast %30 : vector<16xf32> to vector<16x1xf32>
    %cst_11 = arith.constant 0.00833333377 : f32
    %32 = vector.broadcast %cst_11 : f32 to vector<16x1xf32>
    %33 = arith.mulf %28, %32 : vector<16x1xf32>
    %cst_12 = arith.constant 0.00833333377 : f32
    %34 = vector.broadcast %cst_12 : f32 to vector<16x1xf32>
    %35 = arith.mulf %31, %34 : vector<16x1xf32>
    %36 = arith.mulf %33, %33 : vector<16x1xf32>
    %37 = arith.subf %35, %36 : vector<16x1xf32>
    %c0_13 = arith.constant 0 : index
    %c0_14 = arith.constant 0 : index
    %38 = vector.load %arg3[%c0_13, %c0_14] : memref<16x1xf32, #tpu.memory_space<vmem>>, vector<16x1xf32>
    %cst_15 = arith.constant 9.99999974E-6 : f32
    %39 = vector.broadcast %cst_15 : f32 to vector<16x1xf32>
    %40 = arith.addf %37, %39 : vector<16x1xf32>
    %41 = math.rsqrt %40 : vector<16x1xf32>
    %42 = arith.mulf %38, %41 : vector<16x1xf32>
    %c0_16 = arith.constant 0 : index
    %c0_17 = arith.constant 0 : index
    %43 = vector.load %arg4[%c0_16, %c0_17] : memref<16x1xf32, #tpu.memory_space<vmem>>, vector<16x1xf32>
    %44 = arith.mulf %33, %42 : vector<16x1xf32>
    %45 = arith.subf %43, %44 : vector<16x1xf32>
    %46 = vector.broadcast %42 : vector<16x1xf32> to vector<16x256xf32>
    %47 = arith.mulf %5, %46 : vector<16x256xf32>
    %48 = vector.broadcast %45 : vector<16x1xf32> to vector<16x256xf32>
    %49 = arith.addf %47, %48 : vector<16x256xf32>
    %50 = arith.negf %49 : vector<16x256xf32>
    %51 = math.exp %50 : vector<16x256xf32>
    %cst_18 = arith.constant 1.000000e+00 : f32
    %52 = vector.broadcast %cst_18 : f32 to vector<16x256xf32>
    %53 = arith.addf %52, %51 : vector<16x256xf32>
    %54 = arith.divf %52, %53 : vector<16x256xf32>
    %c0_19 = arith.constant 0 : index
    %c0_20 = arith.constant 0 : index
    %55 = vector.load %arg5[%c0_19, %c0_20] : memref<16x256xf32, #tpu.memory_space<vmem>>, vector<16x256xf32>
    tpu.vector_store %arg5[%c0_19, %c0_20], %54 {strides = array<i32>} : memref<16x256xf32, #tpu.memory_space<vmem>>, vector<16x256xf32>,
    return
  }
  func.func @transform_1(%arg0: i32) -> (i32, i32) {
    %c0_i32 = arith.constant 0 : i32
    %c0_i32_0 = arith.constant 0 : i32
    return %arg0, %c0_i32 : i32, i32
  }
  func.func @transform_2(%arg0: i32) -> (i32, i32) {
    %c0_i32 = arith.constant 0 : i32
    %c0_i32_0 = arith.constant 0 : i32
    return %arg0, %c0_i32 : i32, i32
  }
  func.func @transform_3(%arg0: i32) -> (i32, i32) {
    %c0_i32 = arith.constant 0 : i32
    %c0_i32_0 = arith.constant 0 : i32
    return %arg0, %c0_i32 : i32, i32
  }
  func.func @transform_4(%arg0: i32) -> (i32, i32) {
    %c0_i32 = arith.constant 0 : i32
    %c0_i32_0 = arith.constant 0 : i32
    return %arg0, %c0_i32 : i32, i32
  }
}

</mosaic_0001>

<llo_original>
// kernel: tpu_custom_call.1
$region0: #{tpu_custom_call.1}
  #allocation0 [shape = 'u32[]', space=smem, size = 0x4, offset = 0x4, fixed_abs, tag = 'smem constant byte address 0x4 - core index']
  #allocation1 [shape = 'u32[144,128]{1,0:T(1,128)}', space=vmem, size = 0x12000, scoped, tag = 'internal scratch']
  #allocation2 [shape = 'bf16[2,32,132]{2,1,0:T(16,128)(2,1)}', space=vmem, size = 0x8000, scoped, tag = 'scratch operand']
  #allocation3 [shape = 'bf16[96,256]{1,0:T(16,128)(2,1)}', space=vmem, size = 0xc000, scoped, tag = 'scratch operand']
  #allocation4 [shape = 's32[1]{0}', space=sflag, size = 0x4, scoped, tag = 'scratch operand']
  #allocation7 [shape = 's32[]', space=sflag, size = 0x4, offset = 0, fixed_abs, tag = 'sflag constant byte address 0x0 - dummy sync flag']
  %s0 = inlined_call_operand.hbm [shape: bf16[2,32,132], index: 0, kind: input, shape index: {}]
  %s1 = inlined_call_operand.vmem [shape: bf16[16,96], index: 1, kind: input, shape index: {}]
  %s2 = inlined_call_operand.vmem [shape: f32[16,1], index: 2, kind: input, shape index: {}]
  %s3 = inlined_call_operand.vmem [shape: f32[16,1], index: 3, kind: input, shape index: {}]
  %s4 = inlined_call_operand.hbm [shape: f32[16,256], index: 4, kind: output, shape index: {}]
  %s5 = sld [smem:[#allocation0]]
  $region26: #{tpu_custom_call.1} parent=0
    _
  %s7 = ssub.s32 1, %s5
  %s8 = scalar_select 0, %s7, %s5
  $region1: #{tpu_custom_call.1} parent=0
    #allocation5 [shape = 'u8[16384]{0}', space=vmem, size = 0x4000, scoped, tag = 'output window, operand 0, single buffered']
    #allocation6 [shape = 's32[1]{0}', space=sflag, size = 0x4, scoped, tag = 'scoped memory for tpu_custom_call.1']
    %9 = vsyncpa [#allocation6], 0
    // Predicated region
    $region2: #{tpu_custom_call.1} parent=1 // pred_check
      _
    $region3: #{tpu_custom_call.1} parent=1 // pred_check_branch
      %11 = sbr.rel (0) target = $region5
    $region4: #{tpu_custom_call.1} parent=1 // pred_region
      _
    $region5: #{tpu_custom_call.1} parent=1 // pred_fallthru
      _
    // Predicated region
    $region6: #{tpu_custom_call.1} parent=1 // pred_check
      _
    $region7: #{tpu_custom_call.1} parent=1 // pred_check_branch
      %13 = sbr.rel (0) target = $region9
    $region8: #{tpu_custom_call.1} parent=1 // pred_region
      _
    $region9: #{tpu_custom_call.1} parent=1 // pred_fallthru
      _
    // Predicated region
    $region10: #{tpu_custom_call.1} parent=1 // pred_check
      _
    $region11: #{tpu_custom_call.1} parent=1 // pred_check_branch
      %15 = sbr.rel (0) target = $region13
    $region12: #{tpu_custom_call.1} parent=1 // pred_region
      _
    $region13: #{tpu_custom_call.1} parent=1 // pred_fallthru
      _
    %p17 = scmp.eq.s32.totalorder 0, 0
    // Predicated region
    $region14: #{tpu_custom_call.1} parent=1 // pred_check
      %p18 = pneg %p17
    $region15: #{tpu_custom_call.1} parent=1 // pred_check_branch
      %20 = sbr.rel (%p18) target = $region17
    $region16: #{tpu_custom_call.1} parent=1 // pred_region
      #allocation8 [shape = 'u32[9]{0}', space=smem, size = 0x24, scoped, tag = 'DMA stride descriptor']
      %s22 = sshll.u32 1, 14
      %s23 = sxor.u32 4294967295, %s22
      %s25 = sld [smem:[#allocation0]]
      %s26 = sadd.s32 2, %s25
      %s28 = sshll.u32 7, 26
      %s29 = sxor.u32 4294967295, %s28
      %s30 = sand.u32 0, %s29
      %s31 = sshll.u32 %s26, 26
      %s32 = sor.u32 %s30, %s31
      %s33 = sshll.u32 [#allocation2], 4
      %s34 = int_to_ptr.vmem [resolvable:$true] %s33
      %37 = sst [smem:[#allocation8]] 256
      %s38 = scalar_lea.smem [#allocation8], 1
      %39 = sst [smem:[%s38]] 256
      %s40 = scalar_lea.smem [#allocation8], 2
      %41 = sst [smem:[%s40]] 2
      %s42 = scalar_lea.smem [#allocation8], 3
      %43 = sst [smem:[%s42]] 64
      %s44 = scalar_lea.smem [#allocation8], 4
      %45 = sst [smem:[%s44]] 128
      %s46 = scalar_lea.smem [#allocation8], 5
      %47 = sst [smem:[%s46]] 2
      %s48 = scalar_lea.smem [#allocation8], 6
      %49 = sst [smem:[%s48]] 128
      %s50 = scalar_lea.smem [#allocation8], 7
      %51 = sst [smem:[%s50]] 64
      %s52 = scalar_lea.smem [#allocation8], 8
      %53 = sst [smem:[%s52]] 4
      %55 = dma.general %s0, 1024, %s34, [#allocation4], [#allocation7], [#allocation8], %s32, 0
      %s56 = smul.u32 4, 2
      %s57 = smul.u32 %s56, 4
      %s58 = smul.u32 %s57, 2
      %s59 = sshll.u32 %s58, 4
      %60 = dma.done [#allocation4], %s59
      %v61 = vld [vmem:[#allocation2] sm:$0xff]
      %v62 = vld [vmem:[#allocation2 + $0x8] sm:$0xff]
      %v63 = vld [vmem:[#allocation2 + $0x10] sm:$0xff]
      %v64 = vld [vmem:[#allocation2 + $0x18] sm:$0xff]
      %65 = vst [vmem:[#allocation3] sm:$0xff] %v61
      %66 = vst [vmem:[#allocation3 + $0x10] sm:$0xff] %v63
      %71 = vrot.lane.b32.xlu0 %v61, 126
      %v72 = vpop.permute.xlu0 %71
      %73 = vrot.lane.b32.xlu0 %v62, 126
      %v74 = vpop.permute.xlu0 %73
      %75 = vrot.lane.b32.xlu0 %v63, 126
      %v76 = vpop.permute.xlu0 %75
      %77 = vrot.lane.b32.xlu0 %v64, 126
      %v78 = vpop.permute.xlu0 %77
      %vm79 = vcmask 1031168
      %v80 = vsel %vm79, %v72, %v74
      %v81 = vsel %vm79, %v76, %v78
      %84 = vst [vmem:[#allocation3 + $0x20] sm:$0xff] %v80
      %85 = vst [vmem:[#allocation3 + $0x30] sm:$0xff] %v81
      %86 = vrot.lane.b32.xlu0 %v61, 124
      %v87 = vpop.permute.xlu0 %86
      %88 = vrot.lane.b32.xlu0 %v62, 124
      %v89 = vpop.permute.xlu0 %88
      %90 = vrot.lane.b32.xlu0 %v63, 124
      %v91 = vpop.permute.xlu0 %90
      %92 = vrot.lane.b32.xlu0 %v64, 124
      %v93 = vpop.permute.xlu0 %92
      %vm94 = vcmask 1014784
      %v95 = vsel %vm94, %v87, %v89
      %v96 = vsel %vm94, %v91, %v93
      %99 = vst [vmem:[#allocation3 + $0x40] sm:$0xff] %v95
      %100 = vst [vmem:[#allocation3 + $0x50] sm:$0xff] %v96
      %s101 = scalar_lea.vmem [#allocation2], 32
      %v102 = vld [vmem:[%s101] sm:$0xff]
      %v103 = vld [vmem:[%s101 + $0x8] sm:$0xff]
      %v104 = vld [vmem:[%s101 + $0x10] sm:$0xff]
      %v105 = vld [vmem:[%s101 + $0x18] sm:$0xff]
      %106 = vst [vmem:[#allocation3 + $0x8] sm:$0xff] %v102
      %107 = vst [vmem:[#allocation3 + $0x18] sm:$0xff] %v104
      %112 = vrot.lane.b32.xlu0 %v102, 126
      %v113 = vpop.permute.xlu0 %112
      %114 = vrot.lane.b32.xlu0 %v103, 126
      %v115 = vpop.permute.xlu0 %114
      %116 = vrot.lane.b32.xlu0 %v104, 126
      %v117 = vpop.permute.xlu0 %116
      %118 = vrot.lane.b32.xlu0 %v105, 126
      %v119 = vpop.permute.xlu0 %118
      %v120 = vsel %vm79, %v113, %v115
      %v121 = vsel %vm79, %v117, %v119
      %124 = vst [vmem:[#allocation3 + $0x28] sm:$0xff] %v120
      %125 = vst [vmem:[#allocation3 + $0x38] sm:$0xff] %v121
      %126 = vrot.lane.b32.xlu0 %v102, 124
      %v127 = vpop.permute.xlu0 %126
      %128 = vrot.lane.b32.xlu0 %v103, 124
      %v129 = vpop.permute.xlu0 %128
      %130 = vrot.lane.b32.xlu0 %v104, 124
      %v131 = vpop.permute.xlu0 %130
      %132 = vrot.lane.b32.xlu0 %v105, 124
      %v133 = vpop.permute.xlu0 %132
      %v134 = vsel %vm94, %v127, %v129
      %v135 = vsel %vm94, %v131, %v133
      %138 = vst [vmem:[#allocation3 + $0x48] sm:$0xff] %v134
      %139 = vst [vmem:[#allocation3 + $0x58] sm:$0xff] %v135
    $region17: #{tpu_custom_call.1} parent=1 // pred_fallthru
      _
    %v140 = vld [vmem:[%s1] sm:$0xf]
    %v141 = vld [vmem:[%s1 + $0x4] sm:$0xf]
    %v142 = vld [vmem:[#allocation3] sm:$0xff]
    %v143 = vld [vmem:[#allocation3 + $0x8] sm:$0xff]
    %v144 = vld [vmem:[#allocation3 + $0x10] sm:$0xff]
    %v145 = vld [vmem:[#allocation3 + $0x18] sm:$0xff]
    %v146 = vld [vmem:[#allocation3 + $0x20] sm:$0xff]
    %v147 = vld [vmem:[#allocation3 + $0x28] sm:$0xff]
    %v148 = vld [vmem:[#allocation3 + $0x30] sm:$0xff]
    %v149 = vld [vmem:[#allocation3 + $0x38] sm:$0xff]
    %v150 = vld [vmem:[#allocation3 + $0x40] sm:$0xff]
    %v151 = vld [vmem:[#allocation3 + $0x48] sm:$0xff]
    %v152 = vld [vmem:[#allocation3 + $0x50] sm:$0xff]
    %v153 = vld [vmem:[#allocation3 + $0x58] sm:$0xff]
    %v156 = vunpack.c.l.b16 %v140
    %v157 = vunpack.c.l.b16 %v141
    %v158 = vpack.c.b16 %v157, %v156
    %vm159 = vcmask 785408
    %v161 = vsel %vm159, %v158, 0
    %163 = vmatprep.subr.bf16.mxu0 %v143
    %164 = vmatpush1.bf16.msra.mxu0 %v142
    %165 = vmatprep.subr.bf16.mxu0 %v145
    %166 = vmatpush1.bf16.msra.mxu0 %v144
    %167 = vmatprep.subr.bf16.mxu0 %v147
    %168 = vmatpush1.bf16.msra.mxu0 %v146
    %169 = vmatprep.subr.bf16.mxu0 %v149
    %170 = vmatpush1.bf16.msra.mxu0 %v148
    %171 = vmatprep.subr.bf16.mxu0 %v151
    %172 = vmatpush1.bf16.msra.mxu0 %v150
    %173 = vmatprep.subr.bf16.mxu0 %v153
    %174 = vmatpush1.bf16.msra.mxu0 %v152
    %175 = vmatprep.subr.bf16.mxu0 0
    %176 = vmatpush1.bf16.msra.mxu0 0
    %177 = vmatprep.subr.bf16.mxu0 0
    %178 = vmatpush1.bf16.msra.mxu0 0
    %179 = vmatprep.subr.bf16.mxu0 0
    %180 = vmatpush1.bf16.msra.mxu0 0
    %181 = vmatprep.subr.bf16.mxu0 0
    %182 = vmatpush1.bf16.msra.mxu0 0
    %183 = vmatprep.subr.bf16.mxu0 0
    %184 = vmatpush1.bf16.msra.mxu0 0
    %185 = vmatprep.subr.bf16.mxu0 0
    %186 = vmatpush1.bf16.msra.mxu0 0
    %187 = vmatprep.subr.bf16.mxu0 0
    %188 = vmatpush1.bf16.msra.mxu0 0
    %189 = vmatprep.subr.bf16.mxu0 0
    %190 = vmatpush1.bf16.msra.mxu0 0
    %191 = vmatprep.subr.bf16.mxu0 0
    %192 = vmatpush1.bf16.msra.mxu0 0
    %193 = vmatprep.subr.bf16.mxu0 0
    %194 = vmatpush1.bf16.msra.mxu0 0
    %195 = vmatprep.mubr.bf16.mxu0 0
    %196 = vmatmul.mubr.bf16.gmra.mrb[0].mxu0 %v161
    %v197 = vpop.f32.mrb[0].mxu0
    %v198 = vadd.f32 0.0, %v197
    %v199 = vpop.f32.mrb[0].mxu0
    %v200 = vadd.f32 0.0, %v199
    %v201 = vpop.f32.mrb[0].mxu0
    %v202 = vadd.f32 0.0, %v201
    %v203 = vpop.f32.mrb[0].mxu0
    %v204 = vadd.f32 0.0, %v203
    %205 = vdwg.mxu0
    %v206 = vlaneseq
    %v207 = vand.u32 %v206, 127
    %v208 = vadd.s32 %v207, 128
    %vm209 = vcmp.lt.s32.totalorder %v207, 0
    %v210 = vsub.s32 0, %v207
    %v211 = vsel %vm209, %v210, %v207
    %v212 = vshrl.u32 %v211, 7
    %v213 = vand.u32 %v211, 127
    %v214 = vsub.s32 0, %v213
    %v215 = vsel %vm209, %v214, %v213
    %vm216 = vcmp.lt.s32.totalorder %v208, 0
    %v217 = vsub.s32 0, %v208
    %v218 = vsel %vm216, %v217, %v208
    %v219 = vshrl.u32 %v218, 7
    %v220 = vand.u32 %v218, 127
    %v221 = vsub.s32 0, %v220
    %v222 = vsel %vm216, %v221, %v220
    %vm223 = vcmp.ne.s32.totalorder %v215, 0
    %vm224 = vcmp.ne.s32.totalorder %v222, 0
    %vm225 = vcmp.lt.s32.totalorder %v215, 0
    %vm226 = vcmp.lt.s32.totalorder %v222, 0
    %vm227 = vmand %vm225, %vm223
    %vm228 = vmand %vm226, %vm224
    %v229 = vadd.s32 %v215, 128
    %v230 = vadd.s32 %v222, 128
    %v231 = vsel %vm227, %v229, %v215
    %v232 = vsel %vm228, %v230, %v222
    %vm233 = vcmp.lt.s32.totalorder %v231, 60
    %vm234 = vcmp.lt.s32.totalorder %v232, 60
    %v235 = vsel %vm233, %v198, 0.0
    %v236 = vsel %vm234, %v200, 0.0
    %v237 = vsel %vm233, %v202, 0.0
    %v238 = vsel %vm234, %v204, 0.0
    %v239 = vadd.f32 %v235, %v236
    %240 = vadd.xlane.f32.xlu0 %v239
    %v241 = vpop.xlane.xlu0 %240
    %v242 = vadd.f32 %v237, %v238
    %243 = vadd.xlane.f32.xlu0 %v242
    %v244 = vpop.xlane.xlu0 %243
    %v245 = vmul.f32 %v235, %v235
    %v246 = vmul.f32 %v236, %v236
    %v247 = vmul.f32 %v237, %v237
    %v248 = vmul.f32 %v238, %v238
    %v249 = vadd.f32 %v245, %v246
    %250 = vadd.xlane.f32.xlu0 %v249
    %v251 = vpop.xlane.xlu0 %250
    %v252 = vadd.f32 %v247, %v248
    %253 = vadd.xlane.f32.xlu0 %v252
    %v254 = vpop.xlane.xlu0 %253
    %v255 = vmul.f32 %v241, 0.008333334
    %v256 = vmul.f32 %v244, 0.008333334
    %v257 = vmul.f32 %v251, 0.008333334
    %v258 = vmul.f32 %v254, 0.008333334
    %v259 = vmul.f32 %v255, %v255
    %v260 = vmul.f32 %v256, %v256
    %v261 = vsub.f32 %v257, %v259
    %v262 = vsub.f32 %v258, %v260
    %v263 = vld [vmem:[%s2] sm:$0xff]
    %v264 = vld [vmem:[%s2 + $0x8] sm:$0xff]
    %v265 = vadd.f32 %v261, 1e-05
    %v266 = vadd.f32 %v262, 1e-05
    %v267 = vrsqrt.pop %v265
    %v268 = vrsqrt.pop %v266
    %v269 = vmul.f32 %v263, %v267
    %v270 = vmul.f32 %v264, %v268
    %v271 = vld [vmem:[%s3] sm:$0xff]
    %v272 = vld [vmem:[%s3 + $0x8] sm:$0xff]
    %v273 = vmul.f32 %v255, %v269
    %v274 = vmul.f32 %v256, %v270
    %v275 = vsub.f32 %v271, %v273
    %v276 = vsub.f32 %v272, %v274
    %278 = vset.pattern.permute.xlu0 0
    %279 = vperm.xlu0 %278, %v269
    %v280 = vpop.permute.xlu0 %279
    %283 = vset.pattern.permute.xlu0 0
    %284 = vperm.xlu0 %283, %v270
    %v285 = vpop.permute.xlu0 %284
    %v287 = vmul.f32 %v198, %v280
    %v288 = vmul.f32 %v200, %v280
    %v289 = vmul.f32 %v202, %v285
    %v290 = vmul.f32 %v204, %v285
    %292 = vset.pattern.permute.xlu0 0
    %293 = vperm.xlu0 %292, %v275
    %v294 = vpop.permute.xlu0 %293
    %297 = vset.pattern.permute.xlu0 0
    %298 = vperm.xlu0 %297, %v276
    %v299 = vpop.permute.xlu0 %298
    %v301 = vadd.f32 %v287, %v294
    %v302 = vadd.f32 %v288, %v294
    %v303 = vadd.f32 %v289, %v299
    %v304 = vadd.f32 %v290, %v299
    %v305 = vxor.u32 %v301, 2147483648
    %v306 = vxor.u32 %v302, 2147483648
    %v307 = vxor.u32 %v303, 2147483648
    %v308 = vxor.u32 %v304, 2147483648
    %v309 = vmul.f32 %v305, 1.442695
    %v310 = vpow.pop %v309
    %v311 = vmul.f32 %v306, 1.442695
    %v312 = vpow.pop %v311
    %v313 = vmul.f32 %v307, 1.442695
    %v314 = vpow.pop %v313
    %v315 = vmul.f32 %v308, 1.442695
    %v316 = vpow.pop %v315
    %v317 = vadd.f32 %v310, 1.0
    %v318 = vadd.f32 %v312, 1.0
    %v319 = vadd.f32 %v314, 1.0
    %v320 = vadd.f32 %v316, 1.0
    %v321 = vrcp.pop %v317
    %v322 = vmul.f32 1.0, %v321
    %v323 = vrcp.pop %v318
    %v324 = vmul.f32 1.0, %v323
    %v325 = vrcp.pop %v319
    %v326 = vmul.f32 1.0, %v325
    %v327 = vrcp.pop %v320
    %v328 = vmul.f32 1.0, %v327
    %329 = vst [vmem:[#allocation5] sm:$0xff] %v322
    %330 = vst [vmem:[#allocation5 + $0x8] sm:$0xff] %v324
    %331 = vst [vmem:[#allocation5 + $0x10] sm:$0xff] %v326
    %332 = vst [vmem:[#allocation5 + $0x18] sm:$0xff] %v328
    // Predicated region
    $region18: #{tpu_custom_call.1} parent=1 // pred_check
      _
    $region19: #{tpu_custom_call.1} parent=1 // pred_check_branch
      %334 = sbr.rel (0) target = $region21
    $region20: #{tpu_custom_call.1} parent=1 // pred_region
      %s336 = ssub.s32 512, 512
      %337 = vsyncadd [#allocation6], %s336
      %s338 = sshll.u32 [#allocation5], 4
      %s339 = int_to_ptr.vmem [resolvable:$true] %s338
      %344 = dma.vmem_to_hbm [thread:$0]  %s339, 512, %s4, [#allocation6], 256, 256, 16
    $region21: #{tpu_custom_call.1} parent=1 // pred_fallthru
      _
    // Predicated region
    $region22: #{tpu_custom_call.1} parent=1 // pred_check
      _
    $region23: #{tpu_custom_call.1} parent=1 // pred_check_branch
      %346 = sbr.rel (0) target = $region25
    $region24: #{tpu_custom_call.1} parent=1 // pred_region
      %347 = dma.done [#allocation6], 512
    $region25: #{tpu_custom_call.1} parent=1 // pred_fallthru
      _
    %348 = vsyncpa [#allocation6], 1
  %349 = vsyncmov [#allocation4]
  %s350 = vpop.sfrf %349
  %p351 = scmp.eq.s32.totalorder %s350, 0
  %p352 = pneg %p351
  %354 = shalt.err (%p352)

</llo_original>
